<compile_context>
chip_gen: v7x
topology: tpu7x:2x2x1
jax: 0.10.0
libtpu: 0.0.40
codegen_flags: <defaults>
</compile_context>

<pallas_src>
import jax
import jax.numpy as jnp
from jax import lax
from jax.experimental import pallas as pl
from jax.experimental.pallas import tpu as pltpu


# ----------------------------- Pallas kernel --------------------------------
def _oic_kernel(ids_ref, xprojb_ref, tableT_ref, w1T_ref, b1_ref, w2aT_ref, w4_ref, out_ref):
    # Per grid step (b = batch row, a = action tile):
    #   ids_ref    : (1, ta)   int32   action ids of this tile (lane-major)
    #   xprojb_ref : (Hp, 1)   float32 (x @ w3x + b2 @ w3a + b3)^T for batch row b
    #   tableT_ref : (Dp, Np)  bf16    embedding table, transposed & zero-padded
    #   w1T_ref    : (Hp, Dp)  bf16    first action_linear layer, transposed
    #   b1_ref     : (Hp, 1)   float32
    #   w2aT_ref   : (Hp, Hp)  bf16    (w2 @ w3a)^T  (second layer fused into final head)
    #   w4_ref     : (Hp, 1)   float32 final Linear(H, 1) weight column
    #   out_ref    : (1, ta)   float32 logits, lane-dense
    n_act_p = tableT_ref.shape[1]
    ta = ids_ref.shape[1]

    # Embedding gather as a one-hot matmul (rides the MXU; ids stay lane-major).
    ids = ids_ref[...]                                                     # (1, ta) i32
    hot = jnp.where(
        lax.broadcasted_iota(jnp.int32, (n_act_p, ta), 0) == ids, 1.0, 0.0
    ).astype(jnp.bfloat16)                                                 # (Np, ta)
    embT = jnp.dot(tableT_ref[...], hot,
                   preferred_element_type=jnp.float32)                     # (Dp, ta)

    # action_linear: Linear -> ReLU (its second Linear is fused into w2aT).
    h1T = jnp.maximum(
        jnp.dot(w1T_ref[...], embT.astype(jnp.bfloat16),
                preferred_element_type=jnp.float32) + b1_ref[...], 0.0)    # (Hp, ta)

    # final head: relu(x @ w3x + act @ w3a + b3), with act @ w3a == h1 @ (w2 @ w3a) + b2 @ w3a.
    preT = xprojb_ref[...] + jnp.dot(w2aT_ref[...], h1T.astype(jnp.bfloat16),
                                     preferred_element_type=jnp.float32)   # (Hp, ta)
    h3T = jnp.maximum(preT, 0.0)

    # Last Linear(H, 1): per-action dot product as a sublane (XLU) reduce -> lane-dense store.
    out_ref[...] = jnp.sum(h3T * w4_ref[...], axis=0, keepdims=True)       # (1, ta)


# ------------------------------ JAX wrapper ----------------------------------
def _round_up(v, m):
    return (v + m - 1) // m * m


def _pad2(a, rows, cols):
    return jnp.zeros((rows, cols), a.dtype).at[: a.shape[0], : a.shape[1]].set(a)


def order_invariant_categorical(x, add_input, params, emb_table, *, ta=None):
    """Returns the Categorical logits of shape [B, A] (float32).

    x:         [B, num_inputs] float32
    add_input: [B, A] action ids (the PyTorch code receives floats and calls .long())
    """
    B, _ = x.shape
    A = add_input.shape[1]
    (w1, b1, w2, b2, w3x, w3a, b3, w4, b4) = params
    hidden = w1.shape[1]
    n_act, action_dim = emb_table.shape

    # --- tile sizes & padding (lane dims must be multiples of 128) -------------
    if ta is None:
        ta = min(1024, _round_up(A, 128))          # actions per grid step (lane axis)
    ta = _round_up(ta, 128)
    a_pad = _round_up(A, ta)                       # pad A instead of asserting divisibility
    hp = _round_up(hidden, 128)                    # hidden: lane/M/K dim of the big matmuls
    dp = _round_up(action_dim, 8)                  # small resident dims: sublane alignment
    np_ = _round_up(n_act, 8)

    # --- parameter fusion / transposition (tiny; plain XLA) --------------------
    w2a = w2 @ w3a                                 # second action_linear layer folded in
    b_fused = b2 @ w3a + b3                        # its bias pushed through w3a
    xprojb = x @ w3x + b_fused                     # per-batch-row x branch + fused biases

    tableT = _pad2(emb_table, np_, dp).T.astype(jnp.bfloat16)     # (dp, np_)
    w1T = _pad2(w1, dp, hp).T.astype(jnp.bfloat16)                # (hp, dp)
    b1c = _pad2(b1, 1, hp).T                                      # (hp, 1)  f32
    w2aT = _pad2(w2a, hp, hp).T.astype(jnp.bfloat16)              # (hp, hp)
    w4c = _pad2(w4, hp, 1)                                        # (hp, 1)  f32
    xprojb3 = _pad2(xprojb, B, hp).reshape(B, hp, 1)              # (B, hp, 1) f32

    ids = jnp.zeros((B, 1, a_pad), jnp.int32).at[:, 0, :A].set(add_input.astype(jnp.int32))

    # --- pallas call ------------------------------------------------------------
    grid = (B, a_pad // ta)

    def _full(r, c):
        return pl.BlockSpec((r, c), lambda b, a: (0, 0))          # resident weights

    out = pl.pallas_call(
        _oic_kernel,
        out_shape=jax.ShapeDtypeStruct((B, 1, a_pad), jnp.float32),
        grid=grid,
        in_specs=[
            pl.BlockSpec((None, 1, ta), lambda b, a: (b, 0, a)),      # ids tile
            pl.BlockSpec((None, hp, 1), lambda b, a: (b, 0, 0)),      # xprojb (per batch row)
            _full(dp, np_),                                           # tableT
            _full(hp, dp),                                            # w1T
            _full(hp, 1),                                             # b1c
            _full(hp, hp),                                            # w2aT
            _full(hp, 1),                                             # w4c
        ],
        out_specs=pl.BlockSpec((None, 1, ta), lambda b, a: (b, 0, a)),
        compiler_params=pltpu.CompilerParams(
            dimension_semantics=("parallel", "parallel"),
            vmem_limit_bytes=32 * 1024 * 1024),                       # explicit, v7x-safe
    )(ids, xprojb3, tableT, w1T, b1c, w2aT, w4c)

    # squeeze(-1), drop action padding, add final bias; FixedCategorical wraps these logits.
    return out[:, 0, :A] + b4[0, 0]


# ------------------------- pure-JAX reference --------------------------------
def reference(x, add_input, params, emb_table):
    (w1, b1, w2, b2, w3x, w3a, b3, w4, b4) = params
    emb = emb_table[add_input.astype(jnp.int32)]
    h1 = jnp.maximum(emb @ w1 + b1[0], 0.0)
    act = h1 @ w2 + b2[0]
    x_rep = jnp.broadcast_to(x[:, None, :], (x.shape[0], add_input.shape[1], x.shape[1]))
    cat = jnp.concatenate([x_rep, act], axis=-1)
    w3 = jnp.concatenate([w3x, w3a], axis=0)
    h3 = jnp.maximum(cat @ w3 + b3[0], 0.0)
    out = h3 @ w4 + b4[0]
    return out[..., 0]


# --------------------------------- main ---------------------------------------
if __name__ == "__main__":
    # Small shapes implied by the forward pass.
    B = 2                 # batch
    A = 8                 # number of available actions per batch element
    num_inputs = 32       # dim of x
    hidden = 32           # args.dist_hidden_dim
    action_dim = 16       # args.o_dim (use_option_embs=True)
    n_total_actions = 10  # size of dist_mem embedding table

    key = jax.random.PRNGKey(0)
    k = jax.random.split(key, 8)

    # Deterministic parameter init (mimics orthogonal gain=0.01 weights, zero biases).
    emb_table = jax.random.normal(k[0], (n_total_actions, action_dim), jnp.float32)
    w1 = 0.01 * jax.random.normal(k[1], (action_dim, hidden), jnp.float32)
    b1 = jnp.zeros((1, hidden), jnp.float32)
    w2 = 0.01 * jax.random.normal(k[2], (hidden, hidden), jnp.float32)
    b2 = jnp.zeros((1, hidden), jnp.float32)
    # final layer weight split: first num_inputs rows act on x, last `hidden` rows on act.
    w3x = 0.01 * jax.random.normal(k[3], (num_inputs, hidden), jnp.float32)
    w3a = 0.01 * jax.random.normal(k[4], (hidden, hidden), jnp.float32)
    b3 = jnp.zeros((1, hidden), jnp.float32)
    w4 = 0.01 * jax.random.normal(k[5], (hidden, 1), jnp.float32)
    b4 = jnp.zeros((1, 1), jnp.float32)
    params = (w1, b1, w2, b2, w3x, w3a, b3, w4, b4)

    x = jax.random.normal(k[6], (B, num_inputs), jnp.float32)
    add_input = jax.random.randint(k[7], (B, A), 0, n_total_actions).astype(jnp.float32)

    run = jax.jit(order_invariant_categorical)
    logits = run(x, add_input, params, emb_table)
    logits = jax.block_until_ready(logits)

    ref = reference(x, add_input, params, emb_table)
    assert logits.shape == (B, A)
    # bf16 matmul operands (f32 accumulation) -> slightly looser tolerance than pure f32.
    assert jnp.allclose(logits, ref, atol=1e-3, rtol=1e-2), "mismatch vs JAX reference"

    # TODO(synk): use_dist_double (.double()) not applied — float64 is not a practical TPU kernel dtype.
    # FixedCategorical(logits=...) is a thin distribution wrapper around these logits (no extra compute).
    print("KERNEL_OK")
</pallas_src>

<mosaic_0001>
module attributes {stable_mosaic.version = 11 : i64} {
  func.func @_oic_kernel(%arg0: i32, %arg1: i32, %arg2: memref<1x1x128xi32, #tpu.memory_space<vmem>>, %arg3: memref<1x128x1xf32, #tpu.memory_space<vmem>>, %arg4: memref<16x16xbf16, #tpu.memory_space<vmem>>, %arg5: memref<128x16xbf16, #tpu.memory_space<vmem>>, %arg6: memref<128x1xf32, #tpu.memory_space<vmem>>, %arg7: memref<128x128xbf16, #tpu.memory_space<vmem>>, %arg8: memref<128x1xf32, #tpu.memory_space<vmem>>, %arg9: memref<1x1x128xf32, #tpu.memory_space<vmem>>) attributes {dimension_semantics = [#tpu.dimension_semantics<parallel>, #tpu.dimension_semantics<parallel>], iteration_bounds = array<i64: 2, 1>, scalar_prefetch = 0 : i64, scratch_operands = 0 : i64, tpu.core_type = #tpu.core_type<tc>, window_params = [{transform_indices = @transform_0, window_bounds = array<i64: 1, 1, 128>}, {transform_indices = @transform_1, window_bounds = array<i64: 1, 128, 1>}, {pipeline_mode = #tpu.pipeline_mode<synchronous>, transform_indices = @transform_2, window_bounds = array<i64: 16, 16>}, {pipeline_mode = #tpu.pipeline_mode<synchronous>, transform_indices = @transform_3, window_bounds = array<i64: 128, 16>}, {pipeline_mode = #tpu.pipeline_mode<synchronous>, transform_indices = @transform_4, window_bounds = array<i64: 128, 1>}, {pipeline_mode = #tpu.pipeline_mode<synchronous>, transform_indices = @transform_5, window_bounds = array<i64: 128, 128>}, {pipeline_mode = #tpu.pipeline_mode<synchronous>, transform_indices = @transform_6, window_bounds = array<i64: 128, 1>}, {transform_indices = @transform_7, window_bounds = array<i64: 1, 1, 128>}]} {
    %c0 = arith.constant 0 : index
    %c0_0 = arith.constant 0 : index
    %c0_1 = arith.constant 0 : index
    %0 = vector.load %arg2[%c0, %c0_0, %c0_1] : memref<1x1x128xi32, #tpu.memory_space<vmem>>, vector<1x1x128xi32>
    %1 = vector.shape_cast %0 : vector<1x1x128xi32> to vector<1x128xi32>
    %2 = tpu.iota {dimensions = array<i32: 0>} : vector<16x128xi32>
    %3 = vector.broadcast %1 : vector<1x128xi32> to vector<16x128xi32>
    %4 = arith.cmpi eq, %2, %3 : vector<16x128xi32>
    %cst = arith.constant 1.000000e+00 : f32
    %cst_2 = arith.constant 0.000000e+00 : f32
    %5 = vector.broadcast %cst : f32 to vector<16x128xf32>
    %6 = vector.broadcast %cst_2 : f32 to vector<16x128xf32>
    %7 = arith.select %4, %5, %6 : vector<16x128xi1>, vector<16x128xf32>
    %8 = arith.truncf %7 : vector<16x128xf32> to vector<16x128xbf16>
    %c0_3 = arith.constant 0 : index
    %c0_4 = arith.constant 0 : index
    %9 = vector.load %arg4[%c0_3, %c0_4] : memref<16x16xbf16, #tpu.memory_space<vmem>>, vector<16x16xbf16>
    %cst_5 = arith.constant dense<0.000000e+00> : vector<16x128xf32>
    %10 = tpu.matmul %9, %8, %cst_5 {dimension_numbers = #tpu.dot_dimension_numbers<[1], [0], [0], [1], [0, 0, 1, 1], [], []>} : vector<16x16xbf16>, vector<16x128xbf16>, vector<16x128xf32> -> vector<16x128xf32>
    %c0_6 = arith.constant 0 : index
    %c0_7 = arith.constant 0 : index
    %11 = vector.load %arg5[%c0_6, %c0_7] : memref<128x16xbf16, #tpu.memory_space<vmem>>, vector<128x16xbf16>
    %12 = arith.truncf %10 : vector<16x128xf32> to vector<16x128xbf16>
    %cst_8 = arith.constant dense<0.000000e+00> : vector<128x128xf32>
    %13 = tpu.matmul %11, %12, %cst_8 {dimension_numbers = #tpu.dot_dimension_numbers<[1], [0], [0], [1], [0, 0, 1, 1], [], []>} : vector<128x16xbf16>, vector<16x128xbf16>, vector<128x128xf32> -> vector<128x128xf32>
    %c0_9 = arith.constant 0 : index
    %c0_10 = arith.constant 0 : index
    %14 = vector.load %arg6[%c0_9, %c0_10] : memref<128x1xf32, #tpu.memory_space<vmem>>, vector<128x1xf32>
    %15 = vector.broadcast %14 : vector<128x1xf32> to vector<128x128xf32>
    %16 = arith.addf %13, %15 : vector<128x128xf32>
    %cst_11 = arith.constant 0.000000e+00 : f32
    %17 = vector.broadcast %cst_11 : f32 to vector<128x128xf32>
    %18 = arith.maximumf %16, %17 : vector<128x128xf32>
    %c0_12 = arith.constant 0 : index
    %c0_13 = arith.constant 0 : index
    %c0_14 = arith.constant 0 : index
    %19 = vector.load %arg3[%c0_12, %c0_13, %c0_14] : memref<1x128x1xf32, #tpu.memory_space<vmem>>, vector<1x128x1xf32>
    %20 = vector.shape_cast %19 : vector<1x128x1xf32> to vector<128x1xf32>
    %c0_15 = arith.constant 0 : index
    %c0_16 = arith.constant 0 : index
    %21 = vector.load %arg7[%c0_15, %c0_16] : memref<128x128xbf16, #tpu.memory_space<vmem>>, vector<128x128xbf16>
    %22 = arith.truncf %18 : vector<128x128xf32> to vector<128x128xbf16>
    %cst_17 = arith.constant dense<0.000000e+00> : vector<128x128xf32>
    %23 = tpu.matmul %21, %22, %cst_17 {dimension_numbers = #tpu.dot_dimension_numbers<[1], [0], [0], [1], [0, 0, 1, 1], [], []>} : vector<128x128xbf16>, vector<128x128xbf16>, vector<128x128xf32> -> vector<128x128xf32>
    %24 = vector.broadcast %20 : vector<128x1xf32> to vector<128x128xf32>
    %25 = arith.addf %24, %23 : vector<128x128xf32>
    %cst_18 = arith.constant 0.000000e+00 : f32
    %26 = vector.broadcast %cst_18 : f32 to vector<128x128xf32>
    %27 = arith.maximumf %25, %26 : vector<128x128xf32>
    %c0_19 = arith.constant 0 : index
    %c0_20 = arith.constant 0 : index
    %28 = vector.load %arg8[%c0_19, %c0_20] : memref<128x1xf32, #tpu.memory_space<vmem>>, vector<128x1xf32>
    %29 = vector.broadcast %28 : vector<128x1xf32> to vector<128x128xf32>
    %30 = arith.mulf %27, %29 : vector<128x128xf32>
    %cst_21 = arith.constant dense<0.000000e+00> : vector<128xf32>
    %31 = vector.multi_reduction <add>, %30, %cst_21 [0] : vector<128x128xf32> to vector<128xf32>
    %32 = vector.shape_cast %31 : vector<128xf32> to vector<1x128xf32>
    %c0_22 = arith.constant 0 : index
    %c0_23 = arith.constant 0 : index
    %c0_24 = arith.constant 0 : index
    %33 = vector.load %arg9[%c0_22, %c0_23, %c0_24] : memref<1x1x128xf32, #tpu.memory_space<vmem>>, vector<1x1x128xf32>
    %34 = vector.shape_cast %33 : vector<1x1x128xf32> to vector<1x128xf32>
    %35 = vector.shape_cast %32 : vector<1x128xf32> to vector<1x1x128xf32>
    tpu.vector_store %arg9[%c0_22, %c0_23, %c0_24], %35 {strides = array<i32>} : memref<1x1x128xf32, #tpu.memory_space<vmem>>, vector<1x1x128xf32>,
    return
  }
  func.func @transform_0(%arg0: i32, %arg1: i32) -> (i32, i32, i32) {
    %c0_i32 = arith.constant 0 : i32
    %c0_i32_0 = arith.constant 0 : i32
    return %arg0, %c0_i32, %arg1 : i32, i32, i32
  }
  func.func @transform_1(%arg0: i32, %arg1: i32) -> (i32, i32, i32) {
    %c0_i32 = arith.constant 0 : i32
    %c0_i32_0 = arith.constant 0 : i32
    %c0_i32_1 = arith.constant 0 : i32
    return %arg0, %c0_i32, %c0_i32_0 : i32, i32, i32
  }
  func.func @transform_2(%arg0: i32, %arg1: i32) -> (i32, i32) {
    %c0_i32 = arith.constant 0 : i32
    %c0_i32_0 = arith.constant 0 : i32
    %c0_i32_1 = arith.constant 0 : i32
    return %c0_i32, %c0_i32_0 : i32, i32
  }
  func.func @transform_3(%arg0: i32, %arg1: i32) -> (i32, i32) {
    %c0_i32 = arith.constant 0 : i32
    %c0_i32_0 = arith.constant 0 : i32
    %c0_i32_1 = arith.constant 0 : i32
    return %c0_i32, %c0_i32_0 : i32, i32
  }
  func.func @transform_4(%arg0: i32, %arg1: i32) -> (i32, i32) {
    %c0_i32 = arith.constant 0 : i32
    %c0_i32_0 = arith.constant 0 : i32
    %c0_i32_1 = arith.constant 0 : i32
    return %c0_i32, %c0_i32_0 : i32, i32
  }
  func.func @transform_5(%arg0: i32, %arg1: i32) -> (i32, i32) {
    %c0_i32 = arith.constant 0 : i32
    %c0_i32_0 = arith.constant 0 : i32
    %c0_i32_1 = arith.constant 0 : i32
    return %c0_i32, %c0_i32_0 : i32, i32
  }
  func.func @transform_6(%arg0: i32, %arg1: i32) -> (i32, i32) {
    %c0_i32 = arith.constant 0 : i32
    %c0_i32_0 = arith.constant 0 : i32
    %c0_i32_1 = arith.constant 0 : i32
    return %c0_i32, %c0_i32_0 : i32, i32
  }
  func.func @transform_7(%arg0: i32, %arg1: i32) -> (i32, i32, i32) {
    %c0_i32 = arith.constant 0 : i32
    %c0_i32_0 = arith.constant 0 : i32
    return %arg0, %c0_i32, %arg1 : i32, i32, i32
  }
}

</mosaic_0001>

<llo_original>
// kernel: order_invariant_categorical.1
$region0: #{order_invariant_categorical.1}
  #allocation0 [shape = 'u32[]', space=smem, size = 0x4, offset = 0x4, fixed_abs, tag = 'smem constant byte address 0x4 - core index']
  #allocation1 [shape = 'u32[144,128]{1,0:T(1,128)}', space=vmem, size = 0x12000, scoped, tag = 'internal scratch']
  %s0 = inlined_call_operand.vmem [shape: s32[2,1,128], index: 0, kind: input, shape index: {}]
  %s1 = inlined_call_operand.vmem [shape: f32[2,128,1], index: 1, kind: input, shape index: {}]
  %s2 = inlined_call_operand.vmem [shape: bf16[16,16], index: 2, kind: input, shape index: {}]
  %s3 = inlined_call_operand.vmem [shape: bf16[128,16], index: 3, kind: input, shape index: {}]
  %s4 = inlined_call_operand.vmem [shape: f32[128,1], index: 4, kind: input, shape index: {}]
  %s5 = inlined_call_operand.vmem [shape: bf16[128,128], index: 5, kind: input, shape index: {}]
  %s6 = inlined_call_operand.vmem [shape: f32[128,1], index: 6, kind: input, shape index: {}]
  %s7 = inlined_call_operand.vmem [shape: f32[2,1,128], index: 7, kind: output, shape index: {}]
  %s8 = sld [smem:[#allocation0]]
  $region61: #{order_invariant_categorical.1} parent=0
    _
  %s10 = ssub.s32 1, %s8
  %s11 = scalar_select 0, %s10, %s8
  loop: start=0, step=1, limit=4
  $region2: #{order_invariant_categorical.1} parent=0 // loop_pre_header
    _
  $region3: #{order_invariant_categorical.1} parent=0 // loop_header
    %s13 = sphi 0, %s17
    %p14 = scmp.ge.s32.totalorder %s13, 4
    %s20 = sphi 0, %s32
    %s21 = sphi 0, %s28
    %s22 = sphi 0, %s20
    %s23 = sphi 0, %s21
    %s24 = sphi 0, %s22
    %s25 = sphi 0, %s23
    %s37 = sphi 0, %s39
    %s40 = sphi 0, %s37
    %s41 = sphi 0, %s40
    %s57 = sphi 0, %s41
    %s63 = sphi 0, %s65
    %s66 = sphi 0, %s63
    %s67 = sphi 0, %s66
    %s83 = sphi 0, %s67
    %s87 = sphi 0, %s87
    %s89 = sphi 0, %s87
    %s90 = sphi 0, %s89
    %s104 = sphi 0, %s90
    %s108 = sphi 0, %s108
    %s110 = sphi 0, %s108
    %s111 = sphi 0, %s110
    %s125 = sphi 0, %s111
    %s129 = sphi 0, %s129
    %s131 = sphi 0, %s129
    %s132 = sphi 0, %s131
    %s146 = sphi 0, %s132
    %s150 = sphi 0, %s150
    %s152 = sphi 0, %s150
    %s153 = sphi 0, %s152
    %s167 = sphi 0, %s153
    %s171 = sphi 0, %s171
    %s173 = sphi 0, %s171
    %s174 = sphi 0, %s173
    %s188 = sphi 0, %s174
    %s196 = sphi 0, %s198
    %s199 = sphi 0, %s196
    %s200 = sphi 0, %s199
    %s216 = sphi 0, %s200
  $region4: #{order_invariant_categorical.1} parent=0 // loop_header_branch
    %16 = sbr.rel (%p14) target = $region8
  $region5: #{order_invariant_categorical.1} parent=0 // loop_body
    %s18 = ssub.s32 %s13, 1
    %s19 = ssub.s32 %s13, 2
    %s26 = sadd.s32 1, %s21
    %p27 = scmp.ge.s32.totalorder %s26, 1
    %s28 = scalar_select %p27, 0, %s26
    %s29 = sadd.s32 1, %s20
    %s30 = scalar_select %p27, %s29, %s20
    %p31 = scmp.ge.s32.totalorder %s30, 2
    %s32 = scalar_select %p31, 0, %s30
    %s33 = ssub.s32 %s20, %s32
    %s34 = ssub.s32 %s21, %s28
    %s35 = sor.u32 %s33, %s34
    %p36 = scmp.eq.s32.totalorder %s35, 0
    %s38 = sadd.s32 %s37, 1
    %s39 = scalar_select %p36, %s37, %s38
    %p42 = pneg %p36
    %p43 = scmp.eq.s32.totalorder %s13, 1
    %p44 = por %p42, %p43
    %p45 = scmp.ne.s32.totalorder %s37, %s40
    %p46 = scmp.eq.s32.totalorder %s13, 0
    %p47 = por %p45, %p46
    %p48 = scmp.ne.s32.totalorder %s37, %s40
    %p49 = scmp.eq.s32.totalorder %s18, 1
    %p50 = por %p48, %p49
    %p51 = scmp.ne.s32.totalorder %s40, %s41
    %p52 = scmp.eq.s32.totalorder %s18, 0
    %p53 = por %p51, %p52
    %p54 = scmp.ne.s32.totalorder %s40, %s41
    %p55 = scmp.eq.s32.totalorder %s19, 1
    %p56 = por %p54, %p55
    %p58 = scmp.ne.s32.totalorder %s41, %s57
    %p59 = scmp.eq.s32.totalorder %s19, 0
    %p60 = por %p58, %p59
    %s61 = ssub.s32 %s20, %s32
    %p62 = scmp.eq.s32.totalorder %s61, 0
    %s64 = sadd.s32 %s63, 1
    %s65 = scalar_select %p62, %s63, %s64
    %p68 = pneg %p62
    %p69 = scmp.eq.s32.totalorder %s13, 1
    %p70 = por %p68, %p69
    %p71 = scmp.ne.s32.totalorder %s63, %s66
    %p72 = scmp.eq.s32.totalorder %s13, 0
    %p73 = por %p71, %p72
    %p74 = scmp.ne.s32.totalorder %s63, %s66
    %p75 = scmp.eq.s32.totalorder %s18, 1
    %p76 = por %p74, %p75
    %p77 = scmp.ne.s32.totalorder %s66, %s67
    %p78 = scmp.eq.s32.totalorder %s18, 0
    %p79 = por %p77, %p78
    %p80 = scmp.ne.s32.totalorder %s66, %s67
    %p81 = scmp.eq.s32.totalorder %s19, 1
    %p82 = por %p80, %p81
    %p84 = scmp.ne.s32.totalorder %s67, %s83
    %p85 = scmp.eq.s32.totalorder %s19, 0
    %p86 = por %p84, %p85
    %s88 = sadd.s32 %s87, 1
    %p91 = scmp.eq.s32.totalorder %s13, 1
    %p92 = scmp.ne.s32.totalorder %s87, %s89
    %p93 = scmp.eq.s32.totalorder %s13, 0
    %p94 = por %p92, %p93
    %p95 = scmp.ne.s32.totalorder %s87, %s89
    %p96 = scmp.eq.s32.totalorder %s18, 1
    %p97 = por %p95, %p96
    %p98 = scmp.ne.s32.totalorder %s89, %s90
    %p99 = scmp.eq.s32.totalorder %s18, 0
    %p100 = por %p98, %p99
    %p101 = scmp.ne.s32.totalorder %s89, %s90
    %p102 = scmp.eq.s32.totalorder %s19, 1
    %p103 = por %p101, %p102
    %p105 = scmp.ne.s32.totalorder %s90, %s104
    %p106 = scmp.eq.s32.totalorder %s19, 0
    %p107 = por %p105, %p106
    %s109 = sadd.s32 %s108, 1
    %p112 = scmp.eq.s32.totalorder %s13, 1
    %p113 = scmp.ne.s32.totalorder %s108, %s110
    %p114 = scmp.eq.s32.totalorder %s13, 0
    %p115 = por %p113, %p114
    %p116 = scmp.ne.s32.totalorder %s108, %s110
    %p117 = scmp.eq.s32.totalorder %s18, 1
    %p118 = por %p116, %p117
    %p119 = scmp.ne.s32.totalorder %s110, %s111
    %p120 = scmp.eq.s32.totalorder %s18, 0
    %p121 = por %p119, %p120
    %p122 = scmp.ne.s32.totalorder %s110, %s111
    %p123 = scmp.eq.s32.totalorder %s19, 1
    %p124 = por %p122, %p123
    %p126 = scmp.ne.s32.totalorder %s111, %s125
    %p127 = scmp.eq.s32.totalorder %s19, 0
    %p128 = por %p126, %p127
    %s130 = sadd.s32 %s129, 1
    %p133 = scmp.eq.s32.totalorder %s13, 1
    %p134 = scmp.ne.s32.totalorder %s129, %s131
    %p135 = scmp.eq.s32.totalorder %s13, 0
    %p136 = por %p134, %p135
    %p137 = scmp.ne.s32.totalorder %s129, %s131
    %p138 = scmp.eq.s32.totalorder %s18, 1
    %p139 = por %p137, %p138
    %p140 = scmp.ne.s32.totalorder %s131, %s132
    %p141 = scmp.eq.s32.totalorder %s18, 0
    %p142 = por %p140, %p141
    %p143 = scmp.ne.s32.totalorder %s131, %s132
    %p144 = scmp.eq.s32.totalorder %s19, 1
    %p145 = por %p143, %p144
    %p147 = scmp.ne.s32.totalorder %s132, %s146
    %p148 = scmp.eq.s32.totalorder %s19, 0
    %p149 = por %p147, %p148
    %s151 = sadd.s32 %s150, 1
    %p154 = scmp.eq.s32.totalorder %s13, 1
    %p155 = scmp.ne.s32.totalorder %s150, %s152
    %p156 = scmp.eq.s32.totalorder %s13, 0
    %p157 = por %p155, %p156
    %p158 = scmp.ne.s32.totalorder %s150, %s152
    %p159 = scmp.eq.s32.totalorder %s18, 1
    %p160 = por %p158, %p159
    %p161 = scmp.ne.s32.totalorder %s152, %s153
    %p162 = scmp.eq.s32.totalorder %s18, 0
    %p163 = por %p161, %p162
    %p164 = scmp.ne.s32.totalorder %s152, %s153
    %p165 = scmp.eq.s32.totalorder %s19, 1
    %p166 = por %p164, %p165
    %p168 = scmp.ne.s32.totalorder %s153, %s167
    %p169 = scmp.eq.s32.totalorder %s19, 0
    %p170 = por %p168, %p169
    %s172 = sadd.s32 %s171, 1
    %p175 = scmp.eq.s32.totalorder %s13, 1
    %p176 = scmp.ne.s32.totalorder %s171, %s173
    %p177 = scmp.eq.s32.totalorder %s13, 0
    %p178 = por %p176, %p177
    %p179 = scmp.ne.s32.totalorder %s171, %s173
    %p180 = scmp.eq.s32.totalorder %s18, 1
    %p181 = por %p179, %p180
    %p182 = scmp.ne.s32.totalorder %s173, %s174
    %p183 = scmp.eq.s32.totalorder %s18, 0
    %p184 = por %p182, %p183
    %p185 = scmp.ne.s32.totalorder %s173, %s174
    %p186 = scmp.eq.s32.totalorder %s19, 1
    %p187 = por %p185, %p186
    %p189 = scmp.ne.s32.totalorder %s174, %s188
    %p190 = scmp.eq.s32.totalorder %s19, 0
    %p191 = por %p189, %p190
    %s192 = ssub.s32 %s20, %s32
    %s193 = ssub.s32 %s21, %s28
    %s194 = sor.u32 %s192, %s193
    %p195 = scmp.eq.s32.totalorder %s194, 0
    %s197 = sadd.s32 %s196, 1
    %s198 = scalar_select %p195, %s196, %s197
    %p201 = pneg %p195
    %p202 = scmp.eq.s32.totalorder %s13, 1
    %p203 = por %p201, %p202
    %p204 = scmp.ne.s32.totalorder %s196, %s199
    %p205 = scmp.eq.s32.totalorder %s13, 0
    %p206 = por %p204, %p205
    %p207 = scmp.ne.s32.totalorder %s196, %s199
    %p208 = scmp.eq.s32.totalorder %s18, 1
    %p209 = por %p207, %p208
    %p210 = scmp.ne.s32.totalorder %s199, %s200
    %p211 = scmp.eq.s32.totalorder %s18, 0
    %p212 = por %p210, %p211
    %p213 = scmp.ne.s32.totalorder %s199, %s200
    %p214 = scmp.eq.s32.totalorder %s19, 1
    %p215 = por %p213, %p214
    %p217 = scmp.ne.s32.totalorder %s200, %s216
    %p218 = scmp.eq.s32.totalorder %s19, 0
    %p219 = por %p217, %p218
    %p220 = scmp.le.s32.totalorder 1, %s13
    %p221 = scmp.lt.s32.totalorder %s13, 3
    %p222 = pnand %p220, %p221
    %p223 = pneg %p222
    // Predicated region
    $region9: #{order_invariant_categorical.1} parent=5 // pred_check
      _
    $region10: #{order_invariant_categorical.1} parent=5 // pred_check_branch
      %225 = sbr.rel (%p222) target = $region12
    $region11: #{order_invariant_categorical.1} parent=5 // pred_region
      %s226 = ssub.s32 %s13, 1
      // Predicated region
      $region13: #{order_invariant_categorical.1} parent=11 // pred_check
        %p227 = pneg %p100
      $region14: #{order_invariant_categorical.1} parent=11 // pred_check_branch
        %229 = sbr.rel (%p227) target = $region16
      $region15: #{order_invariant_categorical.1} parent=11 // pred_region
        _
      $region16: #{order_invariant_categorical.1} parent=11 // pred_fallthru
        _
      // Predicated region
      $region17: #{order_invariant_categorical.1} parent=11 // pred_check
        %p230 = pneg %p121
      $region18: #{order_invariant_categorical.1} parent=11 // pred_check_branch
        %232 = sbr.rel (%p230) target = $region20
      $region19: #{order_invariant_categorical.1} parent=11 // pred_region
        _
      $region20: #{order_invariant_categorical.1} parent=11 // pred_fallthru
        _
      // Predicated region
      $region21: #{order_invariant_categorical.1} parent=11 // pred_check
        %p233 = pneg %p142
      $region22: #{order_invariant_categorical.1} parent=11 // pred_check_branch
        %235 = sbr.rel (%p233) target = $region24
      $region23: #{order_invariant_categorical.1} parent=11 // pred_region
        _
      $region24: #{order_invariant_categorical.1} parent=11 // pred_fallthru
        _
      // Predicated region
      $region25: #{order_invariant_categorical.1} parent=11 // pred_check
        %p236 = pneg %p163
      $region26: #{order_invariant_categorical.1} parent=11 // pred_check_branch
        %238 = sbr.rel (%p236) target = $region28
      $region27: #{order_invariant_categorical.1} parent=11 // pred_region
        _
      $region28: #{order_invariant_categorical.1} parent=11 // pred_fallthru
        _
      // Predicated region
      $region29: #{order_invariant_categorical.1} parent=11 // pred_check
        %p239 = pneg %p184
      $region30: #{order_invariant_categorical.1} parent=11 // pred_check_branch
        %241 = sbr.rel (%p239) target = $region32
      $region31: #{order_invariant_categorical.1} parent=11 // pred_region
        _
      $region32: #{order_invariant_categorical.1} parent=11 // pred_fallthru
        _
    $region12: #{order_invariant_categorical.1} parent=5 // pred_fallthru
      _
    %p242 = scmp.lt.s32.totalorder %s13, 2
    // Predicated region
    $region33: #{order_invariant_categorical.1} parent=5 // pred_check
      %p243 = pneg %p242
    $region34: #{order_invariant_categorical.1} parent=5 // pred_check_branch
      %245 = sbr.rel (%p243) target = $region36
    $region35: #{order_invariant_categorical.1} parent=5 // pred_region
      // Predicated region
      $region37: #{order_invariant_categorical.1} parent=35 // pred_check
        %p246 = pneg %p47
      $region38: #{order_invariant_categorical.1} parent=35 // pred_check_branch
        %248 = sbr.rel (%p246) target = $region40
      $region39: #{order_invariant_categorical.1} parent=35 // pred_region
        %p249 = scmp.lt.s32.totalorder %s20, 1
        %s250 = scalar_select %p249, %s20, 1
        %p251 = scmp.lt.s32.totalorder %s21, 0
        %s252 = scalar_select %p251, %s21, 0
        %s253 = sadd.s32 %s252, %s250
        %s254 = scalar_lea.vmem %s0, %s253
      $region40: #{order_invariant_categorical.1} parent=35 // pred_fallthru
        _
      // Predicated region
      $region41: #{order_invariant_categorical.1} parent=35 // pred_check
        %p255 = pneg %p73
      $region42: #{order_invariant_categorical.1} parent=35 // pred_check_branch
        %257 = sbr.rel (%p255) target = $region44
      $region43: #{order_invariant_categorical.1} parent=35 // pred_region
        %p258 = scmp.lt.s32.totalorder %s20, 1
        %s259 = scalar_select %p258, %s20, 1
        %s260 = smul.addr %s259, 16
        %s261 = smul.addr %s260, 8
        %s262 = scalar_lea.vmem %s1, %s261
      $region44: #{order_invariant_categorical.1} parent=35 // pred_fallthru
        _
    $region36: #{order_invariant_categorical.1} parent=5 // pred_fallthru
      _
    %p263 = scmp.le.s32.totalorder 1, %s13
    %p264 = scmp.lt.s32.totalorder %s13, 3
    %p265 = pnand %p263, %p264
    %p266 = pneg %p265
    // Predicated region
    $region45: #{order_invariant_categorical.1} parent=5 // pred_check
      _
    $region46: #{order_invariant_categorical.1} parent=5 // pred_check_branch
      %268 = sbr.rel (%p265) target = $region48
    $region47: #{order_invariant_categorical.1} parent=5 // pred_region
      %s269 = ssub.s32 %s13, 1
      %p270 = scmp.lt.s32.totalorder %s22, 1
      %s271 = scalar_select %p270, %s22, 1
      %p272 = scmp.lt.s32.totalorder %s23, 0
      %s273 = scalar_select %p272, %s23, 0
      %s274 = sadd.s32 %s273, %s271
      %s275 = scalar_lea.vmem %s0, %s274
      %p276 = pneg %p53
      %p277 = pneg %p50
      %p278 = scmp.lt.s32.totalorder %s22, 1
      %s279 = scalar_select %p278, %s22, 1
      %s280 = smul.addr %s279, 16
      %s281 = smul.addr %s280, 8
      %s282 = scalar_lea.vmem %s1, %s281
      %p283 = pneg %p79
      %p284 = pneg %p76
      %p285 = pneg %p100
      %p286 = pneg %p97
      %p287 = pneg %p121
      %p288 = pneg %p118
      %p289 = pneg %p142
      %p290 = pneg %p139
      %p291 = pneg %p163
      %p292 = pneg %p160
      %p293 = pneg %p184
      %p294 = pneg %p181
      %p295 = pneg %p212
      %p296 = pneg %p209
      %p297 = scmp.lt.s32.totalorder %s22, 1
      %s298 = scalar_select %p297, %s22, 1
      %p299 = scmp.lt.s32.totalorder %s23, 0
      %s300 = scalar_select %p299, %s23, 0
      %s301 = sadd.s32 %s300, %s298
      %s302 = scalar_lea.vmem %s7, %s301
      %p303 = scmp.lt.s32.totalorder %s22, 1
      %s304 = scalar_select %p303, %s22, 1
      %p305 = scmp.lt.s32.totalorder %s23, 0
      %s306 = scalar_select %p305, %s23, 0
      %s307 = sadd.s32 %s306, %s304
      %s308 = scalar_lea.vmem %s0, %s307
      %p309 = scmp.lt.s32.totalorder %s22, 1
      %s310 = scalar_select %p309, %s22, 1
      %s311 = smul.addr %s310, 16
      %s312 = smul.addr %s311, 8
      %s313 = scalar_lea.vmem %s1, %s312
      %p314 = scmp.lt.s32.totalorder %s22, 1
      %s315 = scalar_select %p314, %s22, 1
      %p316 = scmp.lt.s32.totalorder %s23, 0
      %s317 = scalar_select %p316, %s23, 0
      %s318 = sadd.s32 %s317, %s315
      %s319 = scalar_lea.vmem %s7, %s318
      %v321 = vld [vmem:[%s308] sm:$0x1]
      %v322 = vlaneseq
      %v323 = vshrl.u32 %v322, 7
      %v324 = vadd.s32 %v323, 8
      %v325 = vlaneseq
      %v326 = vshrl.u32 %v325, 7
      %v327 = vsub.s32 0, %v326
      %v328 = vrot.slane %v321, %v327
      %vm329 = vcmp.eq.s32.totalorder %v323, %v328
      %vm330 = vcmp.eq.s32.totalorder %v324, %v328
      %v331 = vsel %vm329, 1.0, 0.0
      %v332 = vsel %vm330, 1.0, 0.0
      %v333 = vpack.c.bf16 %v332, %v331
      %v334 = vld [vmem:[%s2] sm:$0xf]
      %v335 = vld [vmem:[%s2 + $0x4] sm:$0xf]
      %v338 = vunpack.c.l.b16 %v334
      %v339 = vunpack.c.l.b16 %v335
      %v340 = vpack.c.b16 %v339, %v338
      %vm341 = vcmask 130048
      %v343 = vsel %vm341, %v340, 0
      %345 = vmatprep.subr.bf16.mxu0 0
      %346 = vmatpush1.bf16.msra.mxu0 %v333
      %347 = vmatprep.subr.bf16.mxu0 0
      %348 = vmatpush1.bf16.msra.mxu0 0
      %349 = vmatprep.subr.bf16.mxu0 0
      %350 = vmatpush1.bf16.msra.mxu0 0
      %351 = vmatprep.subr.bf16.mxu0 0
      %352 = vmatpush1.bf16.msra.mxu0 0
      %353 = vmatprep.subr.bf16.mxu0 0
      %354 = vmatpush1.bf16.msra.mxu0 0
      %355 = vmatprep.subr.bf16.mxu0 0
      %356 = vmatpush1.bf16.msra.mxu0 0
      %357 = vmatprep.subr.bf16.mxu0 0
      %358 = vmatpush1.bf16.msra.mxu0 0
      %359 = vmatprep.subr.bf16.mxu0 0
      %360 = vmatpush1.bf16.msra.mxu0 0
      %361 = vmatprep.subr.bf16.mxu0 0
      %362 = vmatpush1.bf16.msra.mxu0 0
      %363 = vmatprep.subr.bf16.mxu0 0
      %364 = vmatpush1.bf16.msra.mxu0 0
      %365 = vmatprep.subr.bf16.mxu0 0
      %366 = vmatpush1.bf16.msra.mxu0 0
      %367 = vmatprep.subr.bf16.mxu0 0
      %368 = vmatpush1.bf16.msra.mxu0 0
      %369 = vmatprep.subr.bf16.mxu0 0
      %370 = vmatpush1.bf16.msra.mxu0 0
      %371 = vmatprep.subr.bf16.mxu0 0
      %372 = vmatpush1.bf16.msra.mxu0 0
      %373 = vmatprep.subr.bf16.mxu0 0
      %374 = vmatpush1.bf16.msra.mxu0 0
      %375 = vmatprep.subr.bf16.mxu0 0
      %376 = vmatpush1.bf16.msra.mxu0 0
      %377 = vmatprep.mubr.bf16.mxu0 0
      %378 = vmatmul.mubr.bf16.gmra.mrb[0].mxu0 %v343
      %v379 = vpop.f32.mrb[0].mxu0
      %v380 = vadd.f32 0.0, %v379
      %v381 = vpop.f32.mrb[0].mxu0
      %v382 = vpop.f32.mrb[0].mxu0
      %v383 = vadd.f32 0.0, %v382
      %v384 = vpop.f32.mrb[0].mxu0
      %385 = vdwg.mxu0
      %v386 = vld [vmem:[%s3] sm:$0xf]
      %v387 = vld [vmem:[%s3 + $0x4] sm:$0xf]
      %v388 = vld [vmem:[%s3 + $0x8] sm:$0xf]
      %v389 = vld [vmem:[%s3 + $0xc] sm:$0xf]
      %v390 = vld [vmem:[%s3 + $0x10] sm:$0xf]
      %v391 = vld [vmem:[%s3 + $0x14] sm:$0xf]
      %v392 = vld [vmem:[%s3 + $0x18] sm:$0xf]
      %v393 = vld [vmem:[%s3 + $0x1c] sm:$0xf]
      %v394 = vld [vmem:[%s3 + $0x20] sm:$0xf]
      %v395 = vld [vmem:[%s3 + $0x24] sm:$0xf]
      %v396 = vld [vmem:[%s3 + $0x28] sm:$0xf]
      %v397 = vld [vmem:[%s3 + $0x2c] sm:$0xf]
      %v398 = vld [vmem:[%s3 + $0x30] sm:$0xf]
      %v399 = vld [vmem:[%s3 + $0x34] sm:$0xf]
      %v400 = vld [vmem:[%s3 + $0x38] sm:$0xf]
      %v401 = vld [vmem:[%s3 + $0x3c] sm:$0xf]
      %v402 = vpack.c.bf16 %v383, %v380
      %v403 = vld [vmem:[%s4] sm:$0xff]
      %v404 = vld [vmem:[%s4 + $0x8] sm:$0xff]
      %v405 = vld [vmem:[%s4 + $0x10] sm:$0xff]
      %v406 = vld [vmem:[%s4 + $0x18] sm:$0xff]
      %v407 = vld [vmem:[%s4 + $0x20] sm:$0xff]
      %v408 = vld [vmem:[%s4 + $0x28] sm:$0xff]
      %v409 = vld [vmem:[%s4 + $0x30] sm:$0xff]
      %v410 = vld [vmem:[%s4 + $0x38] sm:$0xff]
      %v411 = vld [vmem:[%s4 + $0x40] sm:$0xff]
      %v412 = vld [vmem:[%s4 + $0x48] sm:$0xff]
      %v413 = vld [vmem:[%s4 + $0x50] sm:$0xff]
      %v414 = vld [vmem:[%s4 + $0x58] sm:$0xff]
      %v415 = vld [vmem:[%s4 + $0x60] sm:$0xff]
      %v416 = vld [vmem:[%s4 + $0x68] sm:$0xff]
      %v417 = vld [vmem:[%s4 + $0x70] sm:$0xff]
      %v418 = vld [vmem:[%s4 + $0x78] sm:$0xff]
      %420 = vset.pattern.permute.xlu0 0
      %421 = vperm.xlu0 %420, %v403
      %v422 = vpop.permute.xlu0 %421
      %425 = vset.pattern.permute.xlu0 0
      %426 = vperm.xlu0 %425, %v404
      %v427 = vpop.permute.xlu0 %426
      %430 = vset.pattern.permute.xlu0 0
      %431 = vperm.xlu0 %430, %v405
      %v432 = vpop.permute.xlu0 %431
      %435 = vset.pattern.permute.xlu0 0
      %436 = vperm.xlu0 %435, %v406
      %v437 = vpop.permute.xlu0 %436
      %440 = vset.pattern.permute.xlu0 0
      %441 = vperm.xlu0 %440, %v407
      %v442 = vpop.permute.xlu0 %441
      %445 = vset.pattern.permute.xlu0 0
      %446 = vperm.xlu0 %445, %v408
      %v447 = vpop.permute.xlu0 %446
      %450 = vset.pattern.permute.xlu0 0
      %451 = vperm.xlu0 %450, %v409
      %v452 = vpop.permute.xlu0 %451
      %455 = vset.pattern.permute.xlu0 0
      %456 = vperm.xlu0 %455, %v410
      %v457 = vpop.permute.xlu0 %456
      %460 = vset.pattern.permute.xlu0 0
      %461 = vperm.xlu0 %460, %v411
      %v462 = vpop.permute.xlu0 %461
      %465 = vset.pattern.permute.xlu0 0
      %466 = vperm.xlu0 %465, %v412
      %v467 = vpop.permute.xlu0 %466
      %470 = vset.pattern.permute.xlu0 0
      %471 = vperm.xlu0 %470, %v413
      %v472 = vpop.permute.xlu0 %471
      %475 = vset.pattern.permute.xlu0 0
      %476 = vperm.xlu0 %475, %v414
      %v477 = vpop.permute.xlu0 %476
      %480 = vset.pattern.permute.xlu0 0
      %481 = vperm.xlu0 %480, %v415
      %v482 = vpop.permute.xlu0 %481
      %485 = vset.pattern.permute.xlu0 0
      %486 = vperm.xlu0 %485, %v416
      %v487 = vpop.permute.xlu0 %486
      %490 = vset.pattern.permute.xlu0 0
      %491 = vperm.xlu0 %490, %v417
      %v492 = vpop.permute.xlu0 %491
      %495 = vset.pattern.permute.xlu0 0
      %496 = vperm.xlu0 %495, %v418
      %v497 = vpop.permute.xlu0 %496
      %v515 = vunpack.c.l.b16 %v386
      %v516 = vunpack.c.l.b16 %v387
      %v517 = vunpack.c.l.b16 %v388
      %v518 = vunpack.c.l.b16 %v389
      %v519 = vunpack.c.l.b16 %v390
      %v520 = vunpack.c.l.b16 %v391
      %v521 = vunpack.c.l.b16 %v392
      %v522 = vunpack.c.l.b16 %v393
      %v523 = vunpack.c.l.b16 %v394
      %v524 = vunpack.c.l.b16 %v395
      %v525 = vunpack.c.l.b16 %v396
      %v526 = vunpack.c.l.b16 %v397
      %v527 = vunpack.c.l.b16 %v398
      %v528 = vunpack.c.l.b16 %v399
      %v529 = vunpack.c.l.b16 %v400
      %v530 = vunpack.c.l.b16 %v401
      %v531 = vpack.c.b16 %v516, %v515
      %v532 = vpack.c.b16 %v518, %v517
      %v533 = vpack.c.b16 %v520, %v519
      %v534 = vpack.c.b16 %v522, %v521
      %v535 = vpack.c.b16 %v524, %v523
      %v536 = vpack.c.b16 %v526, %v525
      %v537 = vpack.c.b16 %v528, %v527
      %v538 = vpack.c.b16 %v530, %v529
      %v540 = vsel %vm341, %v531, 0
      %v543 = vsel %vm341, %v532, 0
      %v546 = vsel %vm341, %v533, 0
      %v549 = vsel %vm341, %v534, 0
      %v552 = vsel %vm341, %v535, 0
      %v555 = vsel %vm341, %v536, 0
      %v558 = vsel %vm341, %v537, 0
      %v561 = vsel %vm341, %v538, 0
      %563 = vmatprep.subr.bf16.mxu0 0
      %564 = vmatpush1.bf16.msra.mxu0 %v402
      %565 = vmatprep.subr.bf16.mxu0 0
      %566 = vmatpush1.bf16.msra.mxu0 0
      %567 = vmatprep.subr.bf16.mxu0 0
      %568 = vmatpush1.bf16.msra.mxu0 0
      %569 = vmatprep.subr.bf16.mxu0 0
      %570 = vmatpush1.bf16.msra.mxu0 0
      %571 = vmatprep.subr.bf16.mxu0 0
      %572 = vmatpush1.bf16.msra.mxu0 0
      %573 = vmatprep.subr.bf16.mxu0 0
      %574 = vmatpush1.bf16.msra.mxu0 0
      %575 = vmatprep.subr.bf16.mxu0 0
      %576 = vmatpush1.bf16.msra.mxu0 0
      %577 = vmatprep.subr.bf16.mxu0 0
      %578 = vmatpush1.bf16.msra.mxu0 0
      %579 = vmatprep.subr.bf16.mxu0 0
      %580 = vmatpush1.bf16.msra.mxu0 0
      %581 = vmatprep.subr.bf16.mxu0 0
      %582 = vmatpush1.bf16.msra.mxu0 0
      %583 = vmatprep.subr.bf16.mxu0 0
      %584 = vmatpush1.bf16.msra.mxu0 0
      %585 = vmatprep.subr.bf16.mxu0 0
      %586 = vmatpush1.bf16.msra.mxu0 0
      %587 = vmatprep.subr.bf16.mxu0 0
      %588 = vmatpush1.bf16.msra.mxu0 0
      %589 = vmatprep.subr.bf16.mxu0 0
      %590 = vmatpush1.bf16.msra.mxu0 0
      %591 = vmatprep.subr.bf16.mxu0 0
      %592 = vmatpush1.bf16.msra.mxu0 0
      %593 = vmatprep.subr.bf16.mxu0 0
      %594 = vmatpush1.bf16.msra.mxu0 0
      %595 = vmatprep.mubr.bf16.mxu0 0
      %596 = vmatmul.mubr.bf16.gmra.mrb[0].mxu0 %v540
      %v597 = vpop.f32.mrb[0].mxu0
      %v598 = vadd.f32 %v422, %v597
      %v599 = vpop.f32.mrb[0].mxu0
      %v600 = vpop.f32.mrb[0].mxu0
      %v601 = vadd.f32 %v427, %v600
      %v602 = vpop.f32.mrb[0].mxu0
      %603 = vmatprep.mubr.bf16.mxu0 0
      %604 = vmatmul.mubr.bf16.gmra.mrb[0].mxu0 %v543
      %v605 = vpop.f32.mrb[0].mxu0
      %v606 = vadd.f32 %v432, %v605
      %v607 = vpop.f32.mrb[0].mxu0
      %v608 = vpop.f32.mrb[0].mxu0
      %v609 = vadd.f32 %v437, %v608
      %v610 = vpop.f32.mrb[0].mxu0
      %611 = vmatprep.mubr.bf16.mxu0 0
      %612 = vmatmul.mubr.bf16.gmra.mrb[0].mxu0 %v546
      %v613 = vpop.f32.mrb[0].mxu0
      %v614 = vadd.f32 %v442, %v613
      %v615 = vpop.f32.mrb[0].mxu0
      %v616 = vpop.f32.mrb[0].mxu0
      %v617 = vadd.f32 %v447, %v616
      %v618 = vpop.f32.mrb[0].mxu0
      %619 = vmatprep.mubr.bf16.mxu0 0
      %620 = vmatmul.mubr.bf16.gmra.mrb[0].mxu0 %v549
      %v621 = vpop.f32.mrb[0].mxu0
      %v622 = vadd.f32 %v452, %v621
      %v623 = vpop.f32.mrb[0].mxu0
      %v624 = vpop.f32.mrb[0].mxu0
      %v625 = vadd.f32 %v457, %v624
      %v626 = vpop.f32.mrb[0].mxu0
      %627 = vmatprep.mubr.bf16.mxu0 0
      %628 = vmatmul.mubr.bf16.gmra.mrb[0].mxu0 %v552
      %v629 = vpop.f32.mrb[0].mxu0
      %v630 = vadd.f32 %v462, %v629
      %v631 = vpop.f32.mrb[0].mxu0
      %v632 = vpop.f32.mrb[0].mxu0
      %v633 = vadd.f32 %v467, %v632
      %v634 = vpop.f32.mrb[0].mxu0
      %635 = vmatprep.mubr.bf16.mxu0 0
      %636 = vmatmul.mubr.bf16.gmra.mrb[0].mxu0 %v555
      %v637 = vpop.f32.mrb[0].mxu0
      %v638 = vadd.f32 %v472, %v637
      %v639 = vpop.f32.mrb[0].mxu0
      %v640 = vpop.f32.mrb[0].mxu0
      %v641 = vadd.f32 %v477, %v640
      %v642 = vpop.f32.mrb[0].mxu0
      %643 = vmatprep.mubr.bf16.mxu0 0
      %644 = vmatmul.mubr.bf16.gmra.mrb[0].mxu0 %v558
      %v645 = vpop.f32.mrb[0].mxu0
      %v646 = vadd.f32 %v482, %v645
      %v647 = vpop.f32.mrb[0].mxu0
      %v648 = vpop.f32.mrb[0].mxu0
      %v649 = vadd.f32 %v487, %v648
      %v650 = vpop.f32.mrb[0].mxu0
      %651 = vmatprep.mubr.bf16.mxu0 0
      %652 = vmatmul.mubr.bf16.gmra.mrb[0].mxu0 %v561
      %v653 = vpop.f32.mrb[0].mxu0
      %v654 = vadd.f32 %v492, %v653
      %v655 = vpop.f32.mrb[0].mxu0
      %v656 = vpop.f32.mrb[0].mxu0
      %v657 = vadd.f32 %v497, %v656
      %v658 = vpop.f32.mrb[0].mxu0
      %659 = vdwg.mxu0
      %v660 = vmax.f32 %v598, 0.0
      %v661 = vmax.f32 %v601, 0.0
      %v662 = vmax.f32 %v606, 0.0
      %v663 = vmax.f32 %v609, 0.0
      %v664 = vmax.f32 %v614, 0.0
      %v665 = vmax.f32 %v617, 0.0
      %v666 = vmax.f32 %v622, 0.0
      %v667 = vmax.f32 %v625, 0.0
      %v668 = vmax.f32 %v630, 0.0
      %v669 = vmax.f32 %v633, 0.0
      %v670 = vmax.f32 %v638, 0.0
      %v671 = vmax.f32 %v641, 0.0
      %v672 = vmax.f32 %v646, 0.0
      %v673 = vmax.f32 %v649, 0.0
      %v674 = vmax.f32 %v654, 0.0
      %v675 = vmax.f32 %v657, 0.0
      %v676 = vld [vmem:[%s313] sm:$0xff]
      %v677 = vld [vmem:[%s313 + $0x8] sm:$0xff]
      %v678 = vld [vmem:[%s313 + $0x10] sm:$0xff]
      %v679 = vld [vmem:[%s313 + $0x18] sm:$0xff]
      %v680 = vld [vmem:[%s313 + $0x20] sm:$0xff]
      %v681 = vld [vmem:[%s313 + $0x28] sm:$0xff]
      %v682 = vld [vmem:[%s313 + $0x30] sm:$0xff]
      %v683 = vld [vmem:[%s313 + $0x38] sm:$0xff]
      %v684 = vld [vmem:[%s313 + $0x40] sm:$0xff]
      %v685 = vld [vmem:[%s313 + $0x48] sm:$0xff]
      %v686 = vld [vmem:[%s313 + $0x50] sm:$0xff]
      %v687 = vld [vmem:[%s313 + $0x58] sm:$0xff]
      %v688 = vld [vmem:[%s313 + $0x60] sm:$0xff]
      %v689 = vld [vmem:[%s313 + $0x68] sm:$0xff]
      %v690 = vld [vmem:[%s313 + $0x70] sm:$0xff]
      %v691 = vld [vmem:[%s313 + $0x78] sm:$0xff]
      %v692 = vld [vmem:[%s5] sm:$0xf]
      %v693 = vld [vmem:[%s5 + $0x4] sm:$0xf]
      %v694 = vld [vmem:[%s5 + $0x8] sm:$0xf]
      %v695 = vld [vmem:[%s5 + $0xc] sm:$0xf]
      %v696 = vld [vmem:[%s5 + $0x10] sm:$0xf]
      %v697 = vld [vmem:[%s5 + $0x14] sm:$0xf]
      %v698 = vld [vmem:[%s5 + $0x18] sm:$0xf]
      %v699 = vld [vmem:[%s5 + $0x1c] sm:$0xf]
      %v700 = vld [vmem:[%s5 + $0x20] sm:$0xf]
      %v701 = vld [vmem:[%s5 + $0x24] sm:$0xf]
      %v702 = vld [vmem:[%s5 + $0x28] sm:$0xf]
      %v703 = vld [vmem:[%s5 + $0x2c] sm:$0xf]
      %v704 = vld [vmem:[%s5 + $0x30] sm:$0xf]
      %v705 = vld [vmem:[%s5 + $0x34] sm:$0xf]
      %v706 = vld [vmem:[%s5 + $0x38] sm:$0xf]
      %v707 = vld [vmem:[%s5 + $0x3c] sm:$0xf]
      %v708 = vpack.c.bf16 %v661, %v660
      %v709 = vpack.c.bf16 %v663, %v662
      %v710 = vpack.c.bf16 %v665, %v664
      %v711 = vpack.c.bf16 %v667, %v666
      %v712 = vpack.c.bf16 %v669, %v668
      %v713 = vpack.c.bf16 %v671, %v670
      %v714 = vpack.c.bf16 %v673, %v672
      %v715 = vpack.c.bf16 %v675, %v674
      %v732 = vunpack.c.l.b16 %v692
      %v733 = vunpack.c.l.b16 %v693
      %v734 = vunpack.c.l.b16 %v694
      %v735 = vunpack.c.l.b16 %v695
      %v736 = vunpack.c.l.b16 %v696
      %v737 = vunpack.c.l.b16 %v697
      %v738 = vunpack.c.l.b16 %v698
      %v739 = vunpack.c.l.b16 %v699
      %v740 = vunpack.c.l.b16 %v700
      %v741 = vunpack.c.l.b16 %v701
      %v742 = vunpack.c.l.b16 %v702
      %v743 = vunpack.c.l.b16 %v703
      %v744 = vunpack.c.l.b16 %v704
      %v745 = vunpack.c.l.b16 %v705
      %v746 = vunpack.c.l.b16 %v706
      %v747 = vunpack.c.l.b16 %v707
      %v748 = vpack.c.b16 %v733, %v732
      %v749 = vpack.c.b16 %v735, %v734
      %v750 = vpack.c.b16 %v737, %v736
      %v751 = vpack.c.b16 %v739, %v738
      %v752 = vpack.c.b16 %v741, %v740
      %v753 = vpack.c.b16 %v743, %v742
      %v754 = vpack.c.b16 %v745, %v744
      %v755 = vpack.c.b16 %v747, %v746
      %764 = vmatprep.subr.bf16.mxu0 0
      %765 = vmatpush1.bf16.msra.mxu0 %v708
      %766 = vmatprep.subr.bf16.mxu0 0
      %767 = vmatpush1.bf16.msra.mxu0 %v709
      %768 = vmatprep.subr.bf16.mxu0 0
      %769 = vmatpush1.bf16.msra.mxu0 %v710
      %770 = vmatprep.subr.bf16.mxu0 0
      %771 = vmatpush1.bf16.msra.mxu0 %v711
      %772 = vmatprep.subr.bf16.mxu0 0
      %773 = vmatpush1.bf16.msra.mxu0 %v712
      %774 = vmatprep.subr.bf16.mxu0 0
      %775 = vmatpush1.bf16.msra.mxu0 %v713
      %776 = vmatprep.subr.bf16.mxu0 0
      %777 = vmatpush1.bf16.msra.mxu0 %v714
      %778 = vmatprep.subr.bf16.mxu0 0
      %779 = vmatpush1.bf16.msra.mxu0 %v715
      %780 = vmatprep.subr.bf16.mxu0 0
      %781 = vmatpush1.bf16.msra.mxu0 0
      %782 = vmatprep.subr.bf16.mxu0 0
      %783 = vmatpush1.bf16.msra.mxu0 0
      %784 = vmatprep.subr.bf16.mxu0 0
      %785 = vmatpush1.bf16.msra.mxu0 0
      %786 = vmatprep.subr.bf16.mxu0 0
      %787 = vmatpush1.bf16.msra.mxu0 0
      %788 = vmatprep.subr.bf16.mxu0 0
      %789 = vmatpush1.bf16.msra.mxu0 0
      %790 = vmatprep.subr.bf16.mxu0 0
      %791 = vmatpush1.bf16.msra.mxu0 0
      %792 = vmatprep.subr.bf16.mxu0 0
      %793 = vmatpush1.bf16.msra.mxu0 0
      %794 = vmatprep.subr.bf16.mxu0 0
      %795 = vmatpush1.bf16.msra.mxu0 0
      %796 = vmatprep.mubr.bf16.mxu0 0
      %797 = vmatmul.mubr.bf16.gmra.mrb[0].mxu0 %v748
      %v798 = vpop.f32.mrb[0].mxu0
      %v799 = vadd.f32 0.0, %v798
      %v800 = vpop.f32.mrb[0].mxu0
      %v801 = vpop.f32.mrb[0].mxu0
      %v802 = vadd.f32 0.0, %v801
      %v803 = vpop.f32.mrb[0].mxu0
      %804 = vmatprep.mubr.bf16.mxu0 0
      %805 = vmatmul.mubr.bf16.gmra.mrb[0].mxu0 %v749
      %v806 = vpop.f32.mrb[0].mxu0
      %v807 = vadd.f32 0.0, %v806
      %v808 = vpop.f32.mrb[0].mxu0
      %v809 = vpop.f32.mrb[0].mxu0
      %v810 = vadd.f32 0.0, %v809
      %v811 = vpop.f32.mrb[0].mxu0
      %812 = vmatprep.mubr.bf16.mxu0 0
      %813 = vmatmul.mubr.bf16.gmra.mrb[0].mxu0 %v750
      %v814 = vpop.f32.mrb[0].mxu0
      %v815 = vadd.f32 0.0, %v814
      %v816 = vpop.f32.mrb[0].mxu0
      %v817 = vpop.f32.mrb[0].mxu0
      %v818 = vadd.f32 0.0, %v817
      %v819 = vpop.f32.mrb[0].mxu0
      %820 = vmatprep.mubr.bf16.mxu0 0
      %821 = vmatmul.mubr.bf16.gmra.mrb[0].mxu0 %v751
      %v822 = vpop.f32.mrb[0].mxu0
      %v823 = vadd.f32 0.0, %v822
      %v824 = vpop.f32.mrb[0].mxu0
      %v825 = vpop.f32.mrb[0].mxu0
      %v826 = vadd.f32 0.0, %v825
      %v827 = vpop.f32.mrb[0].mxu0
      %828 = vmatprep.mubr.bf16.mxu0 0
      %829 = vmatmul.mubr.bf16.gmra.mrb[0].mxu0 %v752
      %v830 = vpop.f32.mrb[0].mxu0
      %v831 = vadd.f32 0.0, %v830
      %v832 = vpop.f32.mrb[0].mxu0
      %v833 = vpop.f32.mrb[0].mxu0
      %v834 = vadd.f32 0.0, %v833
      %v835 = vpop.f32.mrb[0].mxu0
      %836 = vmatprep.mubr.bf16.mxu0 0
      %837 = vmatmul.mubr.bf16.gmra.mrb[0].mxu0 %v753
      %v838 = vpop.f32.mrb[0].mxu0
      %v839 = vadd.f32 0.0, %v838
      %v840 = vpop.f32.mrb[0].mxu0
      %v841 = vpop.f32.mrb[0].mxu0
      %v842 = vadd.f32 0.0, %v841
      %v843 = vpop.f32.mrb[0].mxu0
      %844 = vmatprep.mubr.bf16.mxu0 0
      %845 = vmatmul.mubr.bf16.gmra.mrb[0].mxu0 %v754
      %v846 = vpop.f32.mrb[0].mxu0
      %v847 = vadd.f32 0.0, %v846
      %v848 = vpop.f32.mrb[0].mxu0
      %v849 = vpop.f32.mrb[0].mxu0
      %v850 = vadd.f32 0.0, %v849
      %v851 = vpop.f32.mrb[0].mxu0
      %852 = vmatprep.mubr.bf16.mxu0 0
      %853 = vmatmul.mubr.bf16.gmra.mrb[0].mxu0 %v755
      %v854 = vpop.f32.mrb[0].mxu0
      %v855 = vadd.f32 0.0, %v854
      %v856 = vpop.f32.mrb[0].mxu0
      %v857 = vpop.f32.mrb[0].mxu0
      %v858 = vadd.f32 0.0, %v857
      %v859 = vpop.f32.mrb[0].mxu0
      %860 = vdwg.mxu0
      %862 = vset.pattern.permute.xlu0 0
      %863 = vperm.xlu0 %862, %v676
      %v864 = vpop.permute.xlu0 %863
      %867 = vset.pattern.permute.xlu0 0
      %868 = vperm.xlu0 %867, %v677
      %v869 = vpop.permute.xlu0 %868
      %872 = vset.pattern.permute.xlu0 0
      %873 = vperm.xlu0 %872, %v678
      %v874 = vpop.permute.xlu0 %873
      %877 = vset.pattern.permute.xlu0 0
      %878 = vperm.xlu0 %877, %v679
      %v879 = vpop.permute.xlu0 %878
      %882 = vset.pattern.permute.xlu0 0
      %883 = vperm.xlu0 %882, %v680
      %v884 = vpop.permute.xlu0 %883
      %887 = vset.pattern.permute.xlu0 0
      %888 = vperm.xlu0 %887, %v681
      %v889 = vpop.permute.xlu0 %888
      %892 = vset.pattern.permute.xlu0 0
      %893 = vperm.xlu0 %892, %v682
      %v894 = vpop.permute.xlu0 %893
      %897 = vset.pattern.permute.xlu0 0
      %898 = vperm.xlu0 %897, %v683
      %v899 = vpop.permute.xlu0 %898
      %902 = vset.pattern.permute.xlu0 0
      %903 = vperm.xlu0 %902, %v684
      %v904 = vpop.permute.xlu0 %903
      %907 = vset.pattern.permute.xlu0 0
      %908 = vperm.xlu0 %907, %v685
      %v909 = vpop.permute.xlu0 %908
      %912 = vset.pattern.permute.xlu0 0
      %913 = vperm.xlu0 %912, %v686
      %v914 = vpop.permute.xlu0 %913
      %917 = vset.pattern.permute.xlu0 0
      %918 = vperm.xlu0 %917, %v687
      %v919 = vpop.permute.xlu0 %918
      %922 = vset.pattern.permute.xlu0 0
      %923 = vperm.xlu0 %922, %v688
      %v924 = vpop.permute.xlu0 %923
      %927 = vset.pattern.permute.xlu0 0
      %928 = vperm.xlu0 %927, %v689
      %v929 = vpop.permute.xlu0 %928
      %932 = vset.pattern.permute.xlu0 0
      %933 = vperm.xlu0 %932, %v690
      %v934 = vpop.permute.xlu0 %933
      %937 = vset.pattern.permute.xlu0 0
      %938 = vperm.xlu0 %937, %v691
      %v939 = vpop.permute.xlu0 %938
      %v941 = vadd.f32 %v864, %v799
      %v942 = vadd.f32 %v869, %v802
      %v943 = vadd.f32 %v874, %v807
      %v944 = vadd.f32 %v879, %v810
      %v945 = vadd.f32 %v884, %v815
      %v946 = vadd.f32 %v889, %v818
      %v947 = vadd.f32 %v894, %v823
      %v948 = vadd.f32 %v899, %v826
      %v949 = vadd.f32 %v904, %v831
      %v950 = vadd.f32 %v909, %v834
      %v951 = vadd.f32 %v914, %v839
      %v952 = vadd.f32 %v919, %v842
      %v953 = vadd.f32 %v924, %v847
      %v954 = vadd.f32 %v929, %v850
      %v955 = vadd.f32 %v934, %v855
      %v956 = vadd.f32 %v939, %v858
      %v957 = vmax.f32 %v941, 0.0
      %v958 = vmax.f32 %v942, 0.0
      %v959 = vmax.f32 %v943, 0.0
      %v960 = vmax.f32 %v944, 0.0
      %v961 = vmax.f32 %v945, 0.0
      %v962 = vmax.f32 %v946, 0.0
      %v963 = vmax.f32 %v947, 0.0
      %v964 = vmax.f32 %v948, 0.0
      %v965 = vmax.f32 %v949, 0.0
      %v966 = vmax.f32 %v950, 0.0
      %v967 = vmax.f32 %v951, 0.0
      %v968 = vmax.f32 %v952, 0.0
      %v969 = vmax.f32 %v953, 0.0
      %v970 = vmax.f32 %v954, 0.0
      %v971 = vmax.f32 %v955, 0.0
      %v972 = vmax.f32 %v956, 0.0
      %v973 = vld [vmem:[%s6] sm:$0xff]
      %v974 = vld [vmem:[%s6 + $0x8] sm:$0xff]
      %v975 = vld [vmem:[%s6 + $0x10] sm:$0xff]
      %v976 = vld [vmem:[%s6 + $0x18] sm:$0xff]
      %v977 = vld [vmem:[%s6 + $0x20] sm:$0xff]
      %v978 = vld [vmem:[%s6 + $0x28] sm:$0xff]
      %v979 = vld [vmem:[%s6 + $0x30] sm:$0xff]
      %v980 = vld [vmem:[%s6 + $0x38] sm:$0xff]
      %v981 = vld [vmem:[%s6 + $0x40] sm:$0xff]
      %v982 = vld [vmem:[%s6 + $0x48] sm:$0xff]
      %v983 = vld [vmem:[%s6 + $0x50] sm:$0xff]
      %v984 = vld [vmem:[%s6 + $0x58] sm:$0xff]
      %v985 = vld [vmem:[%s6 + $0x60] sm:$0xff]
      %v986 = vld [vmem:[%s6 + $0x68] sm:$0xff]
      %v987 = vld [vmem:[%s6 + $0x70] sm:$0xff]
      %v988 = vld [vmem:[%s6 + $0x78] sm:$0xff]
      %990 = vset.pattern.permute.xlu0 0
      %991 = vperm.xlu0 %990, %v973
      %v992 = vpop.permute.xlu0 %991
      %995 = vset.pattern.permute.xlu0 0
      %996 = vperm.xlu0 %995, %v974
      %v997 = vpop.permute.xlu0 %996
      %1000 = vset.pattern.permute.xlu0 0
      %1001 = vperm.xlu0 %1000, %v975
      %v1002 = vpop.permute.xlu0 %1001
      %1005 = vset.pattern.permute.xlu0 0
      %1006 = vperm.xlu0 %1005, %v976
      %v1007 = vpop.permute.xlu0 %1006
      %1010 = vset.pattern.permute.xlu0 0
      %1011 = vperm.xlu0 %1010, %v977
      %v1012 = vpop.permute.xlu0 %1011
      %1015 = vset.pattern.permute.xlu0 0
      %1016 = vperm.xlu0 %1015, %v978
      %v1017 = vpop.permute.xlu0 %1016
      %1020 = vset.pattern.permute.xlu0 0
      %1021 = vperm.xlu0 %1020, %v979
      %v1022 = vpop.permute.xlu0 %1021
      %1025 = vset.pattern.permute.xlu0 0
      %1026 = vperm.xlu0 %1025, %v980
      %v1027 = vpop.permute.xlu0 %1026
      %1030 = vset.pattern.permute.xlu0 0
      %1031 = vperm.xlu0 %1030, %v981
      %v1032 = vpop.permute.xlu0 %1031
      %1035 = vset.pattern.permute.xlu0 0
      %1036 = vperm.xlu0 %1035, %v982
      %v1037 = vpop.permute.xlu0 %1036
      %1040 = vset.pattern.permute.xlu0 0
      %1041 = vperm.xlu0 %1040, %v983
      %v1042 = vpop.permute.xlu0 %1041
      %1045 = vset.pattern.permute.xlu0 0
      %1046 = vperm.xlu0 %1045, %v984
      %v1047 = vpop.permute.xlu0 %1046
      %1050 = vset.pattern.permute.xlu0 0
      %1051 = vperm.xlu0 %1050, %v985
      %v1052 = vpop.permute.xlu0 %1051
      %1055 = vset.pattern.permute.xlu0 0
      %1056 = vperm.xlu0 %1055, %v986
      %v1057 = vpop.permute.xlu0 %1056
      %1060 = vset.pattern.permute.xlu0 0
      %1061 = vperm.xlu0 %1060, %v987
      %v1062 = vpop.permute.xlu0 %1061
      %1065 = vset.pattern.permute.xlu0 0
      %1066 = vperm.xlu0 %1065, %v988
      %v1067 = vpop.permute.xlu0 %1066
      %v1069 = vmul.f32 %v957, %v992
      %v1070 = vmul.f32 %v958, %v997
      %v1071 = vmul.f32 %v959, %v1002
      %v1072 = vmul.f32 %v960, %v1007
      %v1073 = vmul.f32 %v961, %v1012
      %v1074 = vmul.f32 %v962, %v1017
      %v1075 = vmul.f32 %v963, %v1022
      %v1076 = vmul.f32 %v964, %v1027
      %v1077 = vmul.f32 %v965, %v1032
      %v1078 = vmul.f32 %v966, %v1037
      %v1079 = vmul.f32 %v967, %v1042
      %v1080 = vmul.f32 %v968, %v1047
      %v1081 = vmul.f32 %v969, %v1052
      %v1082 = vmul.f32 %v970, %v1057
      %v1083 = vmul.f32 %v971, %v1062
      %v1084 = vmul.f32 %v972, %v1067
      %v1085 = vadd.f32 %v1069, %v1070
      %v1086 = vadd.f32 %v1085, %v1071
      %v1087 = vadd.f32 %v1086, %v1072
      %v1088 = vadd.f32 %v1087, %v1073
      %v1089 = vadd.f32 %v1088, %v1074
      %v1090 = vadd.f32 %v1089, %v1075
      %v1091 = vadd.f32 %v1090, %v1076
      %v1092 = vadd.f32 %v1091, %v1077
      %v1093 = vadd.f32 %v1092, %v1078
      %v1094 = vadd.f32 %v1093, %v1079
      %v1095 = vadd.f32 %v1094, %v1080
      %v1096 = vadd.f32 %v1095, %v1081
      %v1097 = vadd.f32 %v1096, %v1082
      %v1098 = vadd.f32 %v1097, %v1083
      %v1099 = vadd.f32 %v1098, %v1084
      %v1100 = vrot.slane %v1099, 4
      %v1101 = vadd.f32 %v1099, %v1100
      %v1102 = vrot.slane %v1101, 2
      %v1103 = vadd.f32 %v1101, %v1102
      %v1104 = vrot.slane %v1103, 1
      %v1105 = vadd.f32 %v1103, %v1104
      %1106 = vst [vmem:[%s319] sm:$0x1] %v1105
      %p1107 = scmp.lt.s32.totalorder %s22, 1
      %s1108 = scalar_select %p1107, %s22, 1
      %p1109 = scmp.lt.s32.totalorder %s23, 0
      %s1110 = scalar_select %p1109, %s23, 0
      %s1111 = sadd.s32 %s1110, %s1108
      %s1112 = scalar_lea.vmem %s7, %s1111
      // Predicated region
      $region49: #{order_invariant_categorical.1} parent=47 // pred_check
        %p1113 = pneg %p209
      $region50: #{order_invariant_categorical.1} parent=47 // pred_check_branch
        %1115 = sbr.rel (%p1113) target = $region52
      $region51: #{order_invariant_categorical.1} parent=47 // pred_region
        _
      $region52: #{order_invariant_categorical.1} parent=47 // pred_fallthru
        _
    $region48: #{order_invariant_categorical.1} parent=5 // pred_fallthru
      _
    %p1116 = scmp.le.s32.totalorder 2, %s13
    // Predicated region
    $region53: #{order_invariant_categorical.1} parent=5 // pred_check
      %p1117 = pneg %p1116
    $region54: #{order_invariant_categorical.1} parent=5 // pred_check_branch
      %1119 = sbr.rel (%p1117) target = $region56
    $region55: #{order_invariant_categorical.1} parent=5 // pred_region
      %s1120 = ssub.s32 %s13, 2
      // Predicated region
      $region57: #{order_invariant_categorical.1} parent=55 // pred_check
        %p1121 = pneg %p215
      $region58: #{order_invariant_categorical.1} parent=55 // pred_check_branch
        %1123 = sbr.rel (%p1121) target = $region60
      $region59: #{order_invariant_categorical.1} parent=55 // pred_region
        %p1124 = scmp.lt.s32.totalorder %s24, 1
        %s1125 = scalar_select %p1124, %s24, 1
        %p1126 = scmp.lt.s32.totalorder %s25, 0
        %s1127 = scalar_select %p1126, %s25, 0
        %s1128 = sadd.s32 %s1127, %s1125
        %s1129 = scalar_lea.vmem %s7, %s1128
      $region60: #{order_invariant_categorical.1} parent=55 // pred_fallthru
        _
    $region56: #{order_invariant_categorical.1} parent=5 // pred_fallthru
      _
  $region6: #{order_invariant_categorical.1} parent=0 // loop_footer
    %s17 = sadd.s32 1, %s13
  $region7: #{order_invariant_categorical.1} parent=0 // loop_footer_branch
    %12 = sbr.rel target = $region3
  $region8: #{order_invariant_categorical.1} parent=0 // loop_exit
    _

</llo_original>
